<compile_context>
chip_gen: v5e
topology: v5e:2x2
jax: 0.10.0
libtpu: 0.0.40
codegen_flags: <defaults>
</compile_context>

<pallas_src>
import math

import numpy as np

import jax
import jax.numpy as jnp
from jax.experimental import pallas as pl
from jax.experimental.pallas import tpu as pltpu

# RGLRU hyper-parameters (match the PyTorch module defaults).
MIN_DECAY = 0.001
EPS = 1e-5            # RGLRU eps
SCAN_EPS = 1e-7       # closed_form_rnn_scan eps
_LOG_ONE_MINUS_EPS = math.log(1.0 - EPS)


def _rglru_kernel(x_ref, wc_ref, bc_ref, ds_ref, tri_ref, o_ref,
                  prod_scr, sum_scr):
    # x_ref   : (tT, gw)       time-tile of the input for one (batch, head-group)
    # wc_ref  : (gw, 2*gw)     fused [w_in | w_a] block-diagonal gate weights
    # bc_ref  : (1, 2*gw)      fused [b_in | b_a] gate biases (f32)
    # ds_ref  : (1, gw)        softplus(a_param) + MIN_DECAY (precomputed, f32)
    # tri_ref : (tT, tT)       inclusive lower-triangular constant (resident)
    # o_ref   : (tT, gw)       output h tile
    # prod_scr, sum_scr : (1, gw) f32 scan carry across T tiles
    t_idx = pl.program_id(2)

    @pl.when(t_idx == 0)
    def _():
        # New (batch, head-group): reset the scan carry.
        prod_scr[...] = jnp.ones_like(prod_scr)
        sum_scr[...] = jnp.zeros_like(sum_scr)

    x = x_ref[...]
    xf = x.astype(jnp.float32)            # elementwise math in f32 (v5e-safe)
    xm = x.astype(wc_ref.dtype)           # matmul operands in the weight dtype
    gw = x.shape[1]

    # Fused block-diagonal gate linear (BlockDiagonalLinear forward for both
    # gates at once): one MXU matmul with N = 2*gw, f32 accumulation.
    pre = jnp.dot(xm, wc_ref[...], preferred_element_type=jnp.float32) + bc_ref[...]
    gates = jax.nn.sigmoid(pre)           # one transcendental pass over (tT, 2*gw)
    gate_x = gates[:, :gw]
    gate_a = gates[:, gw:]

    # log_a = -gate_a * (softplus(a_param) + min_decay); a = exp(log_a).clamp(max=1-eps)
    log_a = -gate_a * ds_ref[...]
    a = jnp.minimum(jnp.exp(log_a), 1.0 - EPS)        # clamped decay
    la = jnp.minimum(log_a, _LOG_ONE_MINUS_EPS)       # log of clamped decay

    multiplier = jnp.sqrt(jnp.maximum(1.0 - a * a, EPS))
    nx = xf * gate_x * multiplier                     # normalized gated input

    # ---- vectorized closed-form scan within this T tile -------------------
    # Reference (global over T):
    #   p_prefix[t] = prod_{s<t} a[s];  pp = max(p_prefix, SCAN_EPS)
    #   w = (nx + SCAN_EPS) / pp;       h  = pp * cumsum(w)
    # In-tile cumulative sums along T are small lower-triangular MXU matmuls
    # against the resident `tri` constant; the carry across tiles is
    # (run_prod, run_sum) in (1, gw) scratch.
    # TODO(synk): the reviewer-suggested single N=2*gw cumsum matmul over
    # [la, w] is blocked by the data dependency w -> exp(cumsum(la)).
    tri = tri_ref[...]
    cum_la_incl = jnp.dot(tri, la, preferred_element_type=jnp.float32)
    cum_la_excl = cum_la_incl - la                    # exclusive from inclusive

    prefix = prod_scr[...] * jnp.exp(cum_la_excl)     # global prefix product
    pp = jnp.maximum(prefix, SCAN_EPS)

    w = (nx + SCAN_EPS) / pp                          # exact divide (see review)
    cum_w = jnp.dot(tri, w, preferred_element_type=jnp.float32)
    h = pp * (sum_scr[...] + cum_w)

    o_ref[...] = h.astype(o_ref.dtype)

    # Carry the scan state to the next T tile (last rows of the inclusive
    # cumsums == full-tile sums; no XLU reductions needed).
    prod_scr[...] = prod_scr[...] * jnp.exp(cum_la_incl[-1:, :])
    sum_scr[...] = sum_scr[...] + cum_w[-1:, :]


def _pick_head_group(num_heads, block_width, lane_target=128):
    """Smallest divisor of num_heads whose group width is lane-dense (>= lane_target
    and a multiple of 128); falls back to a single group (gw == width)."""
    for d in range(1, num_heads + 1):
        if num_heads % d:
            continue
        gw = d * block_width
        if gw >= lane_target and gw % 128 == 0:
            return d
    return num_heads


def _pick_time_tile(T, max_tile=128):
    """Largest T tile <= max_tile that divides T and satisfies the sublane
    constraint (multiple of 8, or the full axis)."""
    if T <= max_tile:
        return T
    for cand in range(max_tile - (max_tile % 8), 7, -8):
        if T % cand == 0:
            return cand
    return T


def prepare_rglru_params(w_in, b_in, w_a, b_a, a_param, *,
                         matmul_dtype=jnp.bfloat16, lane_target=128):
    """One-time host-side (numpy) packing of the RG-LRU parameters.

    Returns a dict with:
      w_cat       : (G, gw, 2*gw)  fused [w_in | w_a] block-diagonal weights
      b_cat       : (G, 1, 2*gw)   fused biases (f32)
      decay_scale : (G, 1, gw)     softplus(a_param) + MIN_DECAY (f32)
    Do this once at parameter-load time; not inside the jitted per-call path.
    """
    w_in = np.asarray(w_in, np.float64)
    w_a = np.asarray(w_a, np.float64)
    b_in = np.asarray(b_in, np.float64)
    b_a = np.asarray(b_a, np.float64)
    a_param = np.asarray(a_param, np.float64)

    H, bw, _ = w_in.shape
    D = H * bw
    hpg = _pick_head_group(H, bw, lane_target)
    G = H // hpg
    gw = hpg * bw            # lane-dense at production widths; == D when D < 128

    w_cat = np.zeros((G, gw, 2 * gw), np.float64)
    for g in range(G):
        for j in range(hpg):
            h = g * hpg + j
            rows = slice(j * bw, (j + 1) * bw)
            w_cat[g, rows, j * bw:(j + 1) * bw] = w_in[h]
            w_cat[g, rows, gw + j * bw:gw + (j + 1) * bw] = w_a[h]

    b_cat = np.concatenate([b_in.reshape(G, 1, gw), b_a.reshape(G, 1, gw)], axis=-1)
    decay_scale = (np.logaddexp(0.0, a_param) + MIN_DECAY).reshape(G, 1, gw)

    return dict(
        w_cat=jnp.asarray(w_cat, matmul_dtype),
        b_cat=jnp.asarray(b_cat, jnp.float32),
        decay_scale=jnp.asarray(decay_scale, jnp.float32),
        G=G, gw=gw, D=D,
    )


def rglru_pallas(x, params, *, time_tile=None, max_time_tile=128,
                 vmem_limit_bytes=32 * 1024 * 1024):
    """x: (B, T, D); params: output of prepare_rglru_params.

    The gate-matmul operands run in params['w_cat'].dtype (bf16 recommended on
    every generation — the MXU is bf16-native on v5e/v6e/v7x); accumulation and
    all elementwise math stay f32.
    """
    B, T, D = x.shape
    G, gw = params["G"], params["gw"]
    assert D == params["D"] == G * gw

    tT = _pick_time_tile(T, max_time_tile) if time_tile is None else time_tile
    assert T % tT == 0 and (tT % 8 == 0 or tT == T), (T, tT)

    # Inclusive lower-triangular constant: DMA'd once (constant index_map) and
    # resident across all grid steps — no per-step iota/mask builds.
    tri = jnp.asarray(np.tril(np.ones((tT, tT), np.float32)))

    grid = (B, G, T // tT)   # T innermost ("arbitrary"); B and G are parallel
                             # so v7x megacore shards real work across both TCs
                             # (requires B*G >= 2).
    grid_spec = pltpu.PrefetchScalarGridSpec(
        num_scalar_prefetch=0,
        grid=grid,
        in_specs=[
            pl.BlockSpec((None, tT, gw), lambda b, g, t: (b, t, g)),      # x
            pl.BlockSpec((None, gw, 2 * gw), lambda b, g, t: (g, 0, 0)),  # [w_in|w_a]
            pl.BlockSpec((None, 1, 2 * gw), lambda b, g, t: (g, 0, 0)),   # [b_in|b_a]
            pl.BlockSpec((None, 1, gw), lambda b, g, t: (g, 0, 0)),       # decay scale
            pl.BlockSpec((tT, tT), lambda b, g, t: (0, 0)),               # triangle
        ],
        out_specs=pl.BlockSpec((None, tT, gw), lambda b, g, t: (b, t, g)),
        scratch_shapes=[
            pltpu.VMEM((1, gw), jnp.float32),   # running prefix product of a
            pltpu.VMEM((1, gw), jnp.float32),   # running cumsum of w
        ],
    )

    return pl.pallas_call(
        _rglru_kernel,
        out_shape=jax.ShapeDtypeStruct((B, T, D), x.dtype),
        grid_spec=grid_spec,
        compiler_params=pltpu.CompilerParams(
            dimension_semantics=("parallel", "parallel", "arbitrary"),
            # Per-step footprint is a few small tiles; comfortably under this
            # on every generation including v7x (64 MiB physical VMEM).
            vmem_limit_bytes=vmem_limit_bytes,
        ),
    )(x, params["w_cat"], params["b_cat"], params["decay_scale"], tri)


def rglru_reference(x, w_in, b_in, w_a, b_a, a_param):
    """Pure-JAX reference matching the PyTorch forward semantics."""
    B, T, D = x.shape
    H, bw, _ = w_in.shape
    xb = x.reshape(B, T, H, bw)
    gi = jnp.einsum('bthi,hij->bthj', xb, w_in) + b_in[None, None]
    ga = jnp.einsum('bthi,hij->bthj', xb, w_a) + b_a[None, None]
    gate_x = jax.nn.sigmoid(gi.reshape(B, T, D))
    gate_a = jax.nn.sigmoid(ga.reshape(B, T, D))
    log_a = -gate_a * (jax.nn.softplus(a_param) + MIN_DECAY)
    a = jnp.minimum(jnp.exp(log_a), 1.0 - EPS)
    gated_x = x * gate_x
    mult = jnp.sqrt(jnp.maximum(1.0 - a * a, EPS))
    nx = gated_x * mult
    a_cp = jnp.cumprod(a, axis=1)
    p = jnp.concatenate([jnp.ones((B, 1, D), x.dtype), a_cp], axis=1)
    pp = jnp.maximum(p[:, :-1, :], SCAN_EPS)
    w = (nx + SCAN_EPS) / pp
    S = jnp.cumsum(w, axis=1)
    return pp * S


if __name__ == "__main__":
    # Small shapes consistent with the module: width=32, num_heads=4, T=16, B=2.
    # (T=16 with time_tile=8 exercises the cross-tile scan carry.)
    B, T, WIDTH, NUM_HEADS = 2, 16, 32, 4
    BW = WIDTH // NUM_HEADS

    key = jax.random.PRNGKey(0)
    kx, kwi, kwa = jax.random.split(key, 3)

    x = jax.random.normal(kx, (B, T, WIDTH), dtype=jnp.float32)

    # Deterministic parameter init (mimics xavier-style init on the (H, bw, bw)
    # tensors; biases = 1.0 and a_param = -3.0, as in RGLRU.reset_parameters).
    # TODO(synk): exact orthogonal_ init is a parameter-init detail, not part of
    # the forward pass, so a uniform init is used for the deterministic demo.
    fan_in, fan_out = BW * BW, NUM_HEADS * BW
    bound = math.sqrt(6.0 / (fan_in + fan_out))
    w_in = jax.random.uniform(kwi, (NUM_HEADS, BW, BW), jnp.float32, -bound, bound)
    w_a = jax.random.uniform(kwa, (NUM_HEADS, BW, BW), jnp.float32, -bound, bound)
    b_in = jnp.ones((NUM_HEADS, BW), jnp.float32)
    b_a = jnp.ones((NUM_HEADS, BW), jnp.float32)
    a_param = jnp.full((WIDTH,), -3.0, jnp.float32)

    ref = rglru_reference(x, w_in, b_in, w_a, b_a, a_param)

    # Parameter packing is done once, host-side (numpy), outside any jit.
    params_f32 = prepare_rglru_params(w_in, b_in, w_a, b_a, a_param,
                                      matmul_dtype=jnp.float32)
    params_bf16 = prepare_rglru_params(w_in, b_in, w_a, b_a, a_param,
                                       matmul_dtype=jnp.bfloat16)

    # 1) f32 matmul path, T tiled into 2 chunks of 8 (exercises the carry).
    run_f32 = jax.jit(lambda xx: rglru_pallas(xx, params_f32, time_tile=8))
    out = jax.block_until_ready(run_f32(x))
    assert out.shape == (B, T, WIDTH)
    assert jnp.allclose(out, ref, rtol=2e-5, atol=2e-5), \
        f"f32 max abs err {jnp.max(jnp.abs(out - ref))}"

    # 2) bf16 matmul operands (recommended default on v5e/v6e/v7x): f32
    #    accumulation and f32 elementwise math; gate pre-activations lose a few
    #    decimal digits, so compare against the f32 reference loosely.
    run_bf16 = jax.jit(lambda xx: rglru_pallas(xx, params_bf16))
    out_bf16 = jax.block_until_ready(run_bf16(x))
    assert jnp.allclose(out_bf16, ref, rtol=1e-1, atol=1e-1), \
        f"bf16 max abs err {jnp.max(jnp.abs(out_bf16 - ref))}"

    print("KERNEL_OK")
</pallas_src>

<mosaic_0001>
module attributes {stable_mosaic.version = 11 : i64} {
  func.func @_rglru_kernel(%arg0: i32, %arg1: i32, %arg2: i32, %arg3: memref<1x8x32xf32, #tpu.memory_space<vmem>>, %arg4: memref<1x32x64xf32, #tpu.memory_space<vmem>>, %arg5: memref<1x1x64xf32, #tpu.memory_space<vmem>>, %arg6: memref<1x1x32xf32, #tpu.memory_space<vmem>>, %arg7: memref<8x8xf32, #tpu.memory_space<vmem>>, %arg8: memref<1x8x32xf32, #tpu.memory_space<vmem>>, %arg9: memref<1x32xf32, #tpu.memory_space<vmem>>, %arg10: memref<1x32xf32, #tpu.memory_space<vmem>>) attributes {dimension_semantics = [#tpu.dimension_semantics<parallel>, #tpu.dimension_semantics<parallel>, #tpu.dimension_semantics<arbitrary>], iteration_bounds = array<i64: 2, 1, 2>, scalar_prefetch = 0 : i64, scratch_operands = 2 : i64, tpu.core_type = #tpu.core_type<tc>, window_params = [{transform_indices = @transform_0, window_bounds = array<i64: 1, 8, 32>}, {transform_indices = @transform_1, window_bounds = array<i64: 1, 32, 64>}, {transform_indices = @transform_2, window_bounds = array<i64: 1, 1, 64>}, {transform_indices = @transform_3, window_bounds = array<i64: 1, 1, 32>}, {pipeline_mode = #tpu.pipeline_mode<synchronous>, transform_indices = @transform_4, window_bounds = array<i64: 8, 8>}, {transform_indices = @transform_5, window_bounds = array<i64: 1, 8, 32>}]} {
    %c0_i32 = arith.constant 0 : i32
    %0 = arith.cmpi eq, %arg2, %c0_i32 : i32
    %1 = arith.extui %0 : i1 to i32
    %c0_i32_0 = arith.constant 0 : i32
    %2 = arith.cmpi ne, %1, %c0_i32_0 : i32
    scf.if %2 {
      %cst_39 = arith.constant 1.000000e+00 : f32
      %67 = vector.broadcast %cst_39 : f32 to vector<1x32xf32>
      %c0_40 = arith.constant 0 : index
      %c0_41 = arith.constant 0 : index
      %68 = vector.load %arg9[%c0_40, %c0_41] : memref<1x32xf32, #tpu.memory_space<vmem>>, vector<1x32xf32>
      tpu.vector_store %arg9[%c0_40, %c0_41], %67 {strides = array<i32>} : memref<1x32xf32, #tpu.memory_space<vmem>>, vector<1x32xf32>,
      %cst_42 = arith.constant 0.000000e+00 : f32
      %69 = vector.broadcast %cst_42 : f32 to vector<1x32xf32>
      %c0_43 = arith.constant 0 : index
      %c0_44 = arith.constant 0 : index
      %70 = vector.load %arg10[%c0_43, %c0_44] : memref<1x32xf32, #tpu.memory_space<vmem>>, vector<1x32xf32>
      tpu.vector_store %arg10[%c0_43, %c0_44], %69 {strides = array<i32>} : memref<1x32xf32, #tpu.memory_space<vmem>>, vector<1x32xf32>,
    } else {
    }
    %c0 = arith.constant 0 : index
    %c0_1 = arith.constant 0 : index
    %c0_2 = arith.constant 0 : index
    %3 = vector.load %arg3[%c0, %c0_1, %c0_2] : memref<1x8x32xf32, #tpu.memory_space<vmem>>, vector<1x8x32xf32>
    %4 = vector.shape_cast %3 : vector<1x8x32xf32> to vector<8x32xf32>
    %c0_3 = arith.constant 0 : index
    %c0_4 = arith.constant 0 : index
    %c0_5 = arith.constant 0 : index
    %5 = vector.load %arg4[%c0_3, %c0_4, %c0_5] : memref<1x32x64xf32, #tpu.memory_space<vmem>>, vector<1x32x64xf32>
    %6 = vector.shape_cast %5 : vector<1x32x64xf32> to vector<32x64xf32>
    %cst = arith.constant dense<0.000000e+00> : vector<8x64xf32>
    %7 = tpu.matmul %4, %6, %cst {dimension_numbers = #tpu.dot_dimension_numbers<[1], [0], [0], [1], [0, 0, 1, 1], [], []>} : vector<8x32xf32>, vector<32x64xf32>, vector<8x64xf32> -> vector<8x64xf32>
    %c0_6 = arith.constant 0 : index
    %c0_7 = arith.constant 0 : index
    %c0_8 = arith.constant 0 : index
    %8 = vector.load %arg5[%c0_6, %c0_7, %c0_8] : memref<1x1x64xf32, #tpu.memory_space<vmem>>, vector<1x1x64xf32>
    %9 = vector.shape_cast %8 : vector<1x1x64xf32> to vector<1x64xf32>
    %10 = vector.broadcast %9 : vector<1x64xf32> to vector<8x64xf32>
    %11 = arith.addf %7, %10 : vector<8x64xf32>
    %12 = arith.negf %11 : vector<8x64xf32>
    %13 = math.exp %12 : vector<8x64xf32>
    %cst_9 = arith.constant 1.000000e+00 : f32
    %14 = vector.broadcast %cst_9 : f32 to vector<8x64xf32>
    %15 = arith.addf %14, %13 : vector<8x64xf32>
    %16 = arith.divf %14, %15 : vector<8x64xf32>
    %17 = vector.extract_strided_slice %16 {offsets = [0, 0], sizes = [8, 32], strides = [1, 1]} : vector<8x64xf32> to vector<8x32xf32>
    %18 = vector.extract_strided_slice %16 {offsets = [0, 32], sizes = [8, 32], strides = [1, 1]} : vector<8x64xf32> to vector<8x32xf32>
    %cst_10 = arith.constant 0.000000e+00 : f32
    %19 = vector.broadcast %cst_10 : f32 to vector<8x32xf32>
    %20 = arith.subf %19, %18 : vector<8x32xf32>
    %c0_11 = arith.constant 0 : index
    %c0_12 = arith.constant 0 : index
    %c0_13 = arith.constant 0 : index
    %21 = vector.load %arg6[%c0_11, %c0_12, %c0_13] : memref<1x1x32xf32, #tpu.memory_space<vmem>>, vector<1x1x32xf32>
    %22 = vector.shape_cast %21 : vector<1x1x32xf32> to vector<1x32xf32>
    %23 = vector.broadcast %22 : vector<1x32xf32> to vector<8x32xf32>
    %24 = arith.mulf %20, %23 : vector<8x32xf32>
    %25 = math.exp %24 : vector<8x32xf32>
    %cst_14 = arith.constant 0.999989986 : f32
    %26 = vector.broadcast %cst_14 : f32 to vector<8x32xf32>
    %27 = arith.minimumf %25, %26 : vector<8x32xf32>
    %cst_15 = arith.constant -1.00000498E-5 : f32
    %28 = vector.broadcast %cst_15 : f32 to vector<8x32xf32>
    %29 = arith.minimumf %24, %28 : vector<8x32xf32>
    %30 = arith.mulf %27, %27 : vector<8x32xf32>
    %cst_16 = arith.constant 1.000000e+00 : f32
    %31 = vector.broadcast %cst_16 : f32 to vector<8x32xf32>
    %32 = arith.subf %31, %30 : vector<8x32xf32>
    %cst_17 = arith.constant 9.99999974E-6 : f32
    %33 = vector.broadcast %cst_17 : f32 to vector<8x32xf32>
    %34 = arith.maximumf %32, %33 : vector<8x32xf32>
    %35 = math.sqrt %34 : vector<8x32xf32>
    %36 = arith.mulf %4, %17 : vector<8x32xf32>
    %37 = arith.mulf %36, %35 : vector<8x32xf32>
    %c0_18 = arith.constant 0 : index
    %c0_19 = arith.constant 0 : index
    %38 = vector.load %arg7[%c0_18, %c0_19] : memref<8x8xf32, #tpu.memory_space<vmem>>, vector<8x8xf32>
    %cst_20 = arith.constant dense<0.000000e+00> : vector<8x32xf32>
    %39 = tpu.matmul %38, %29, %cst_20 {dimension_numbers = #tpu.dot_dimension_numbers<[1], [0], [0], [1], [0, 0, 1, 1], [], []>} : vector<8x8xf32>, vector<8x32xf32>, vector<8x32xf32> -> vector<8x32xf32>
    %40 = arith.subf %39, %29 : vector<8x32xf32>
    %c0_21 = arith.constant 0 : index
    %c0_22 = arith.constant 0 : index
    %41 = vector.load %arg9[%c0_21, %c0_22] : memref<1x32xf32, #tpu.memory_space<vmem>>, vector<1x32xf32>
    %42 = math.exp %40 : vector<8x32xf32>
    %43 = vector.broadcast %41 : vector<1x32xf32> to vector<8x32xf32>
    %44 = arith.mulf %43, %42 : vector<8x32xf32>
    %cst_23 = arith.constant 1.000000e-07 : f32
    %45 = vector.broadcast %cst_23 : f32 to vector<8x32xf32>
    %46 = arith.maximumf %44, %45 : vector<8x32xf32>
    %cst_24 = arith.constant 1.000000e-07 : f32
    %47 = vector.broadcast %cst_24 : f32 to vector<8x32xf32>
    %48 = arith.addf %37, %47 : vector<8x32xf32>
    %49 = arith.divf %48, %46 : vector<8x32xf32>
    %cst_25 = arith.constant dense<0.000000e+00> : vector<8x32xf32>
    %50 = tpu.matmul %38, %49, %cst_25 {dimension_numbers = #tpu.dot_dimension_numbers<[1], [0], [0], [1], [0, 0, 1, 1], [], []>} : vector<8x8xf32>, vector<8x32xf32>, vector<8x32xf32> -> vector<8x32xf32>
    %c0_26 = arith.constant 0 : index
    %c0_27 = arith.constant 0 : index
    %51 = vector.load %arg10[%c0_26, %c0_27] : memref<1x32xf32, #tpu.memory_space<vmem>>, vector<1x32xf32>
    %52 = vector.broadcast %51 : vector<1x32xf32> to vector<8x32xf32>
    %53 = arith.addf %52, %50 : vector<8x32xf32>
    %54 = arith.mulf %46, %53 : vector<8x32xf32>
    %c0_28 = arith.constant 0 : index
    %c0_29 = arith.constant 0 : index
    %c0_30 = arith.constant 0 : index
    %55 = vector.load %arg8[%c0_28, %c0_29, %c0_30] : memref<1x8x32xf32, #tpu.memory_space<vmem>>, vector<1x8x32xf32>
    %56 = vector.shape_cast %55 : vector<1x8x32xf32> to vector<8x32xf32>
    %57 = vector.shape_cast %54 : vector<8x32xf32> to vector<1x8x32xf32>
    tpu.vector_store %arg8[%c0_28, %c0_29, %c0_30], %57 {strides = array<i32>} : memref<1x8x32xf32, #tpu.memory_space<vmem>>, vector<1x8x32xf32>,
    %c0_31 = arith.constant 0 : index
    %c0_32 = arith.constant 0 : index
    %58 = vector.load %arg9[%c0_31, %c0_32] : memref<1x32xf32, #tpu.memory_space<vmem>>, vector<1x32xf32>
    %59 = vector.extract_strided_slice %39 {offsets = [7, 0], sizes = [1, 32], strides = [1, 1]} : vector<8x32xf32> to vector<1x32xf32>
    %60 = math.exp %59 : vector<1x32xf32>
    %61 = arith.mulf %58, %60 : vector<1x32xf32>
    %c0_33 = arith.constant 0 : index
    %c0_34 = arith.constant 0 : index
    %62 = vector.load %arg9[%c0_33, %c0_34] : memref<1x32xf32, #tpu.memory_space<vmem>>, vector<1x32xf32>
    tpu.vector_store %arg9[%c0_33, %c0_34], %61 {strides = array<i32>} : memref<1x32xf32, #tpu.memory_space<vmem>>, vector<1x32xf32>,
    %c0_35 = arith.constant 0 : index
    %c0_36 = arith.constant 0 : index
    %63 = vector.load %arg10[%c0_35, %c0_36] : memref<1x32xf32, #tpu.memory_space<vmem>>, vector<1x32xf32>
    %64 = vector.extract_strided_slice %50 {offsets = [7, 0], sizes = [1, 32], strides = [1, 1]} : vector<8x32xf32> to vector<1x32xf32>
    %65 = arith.addf %63, %64 : vector<1x32xf32>
    %c0_37 = arith.constant 0 : index
    %c0_38 = arith.constant 0 : index
    %66 = vector.load %arg10[%c0_37, %c0_38] : memref<1x32xf32, #tpu.memory_space<vmem>>, vector<1x32xf32>
    tpu.vector_store %arg10[%c0_37, %c0_38], %65 {strides = array<i32>} : memref<1x32xf32, #tpu.memory_space<vmem>>, vector<1x32xf32>,
    return
  }
  func.func @transform_0(%arg0: i32, %arg1: i32, %arg2: i32) -> (i32, i32, i32) {
    %c0_i32 = arith.constant 0 : i32
    return %arg0, %arg2, %arg1 : i32, i32, i32
  }
  func.func @transform_1(%arg0: i32, %arg1: i32, %arg2: i32) -> (i32, i32, i32) {
    %c0_i32 = arith.constant 0 : i32
    %c0_i32_0 = arith.constant 0 : i32
    %c0_i32_1 = arith.constant 0 : i32
    return %arg1, %c0_i32, %c0_i32_0 : i32, i32, i32
  }
  func.func @transform_2(%arg0: i32, %arg1: i32, %arg2: i32) -> (i32, i32, i32) {
    %c0_i32 = arith.constant 0 : i32
    %c0_i32_0 = arith.constant 0 : i32
    %c0_i32_1 = arith.constant 0 : i32
    return %arg1, %c0_i32, %c0_i32_0 : i32, i32, i32
  }
  func.func @transform_3(%arg0: i32, %arg1: i32, %arg2: i32) -> (i32, i32, i32) {
    %c0_i32 = arith.constant 0 : i32
    %c0_i32_0 = arith.constant 0 : i32
    %c0_i32_1 = arith.constant 0 : i32
    return %arg1, %c0_i32, %c0_i32_0 : i32, i32, i32
  }
  func.func @transform_4(%arg0: i32, %arg1: i32, %arg2: i32) -> (i32, i32) {
    %c0_i32 = arith.constant 0 : i32
    %c0_i32_0 = arith.constant 0 : i32
    %c0_i32_1 = arith.constant 0 : i32
    return %c0_i32, %c0_i32_0 : i32, i32
  }
  func.func @transform_5(%arg0: i32, %arg1: i32, %arg2: i32) -> (i32, i32, i32) {
    %c0_i32 = arith.constant 0 : i32
    return %arg0, %arg2, %arg1 : i32, i32, i32
  }
}

</mosaic_0001>

<llo_original>
// kernel: _lambda_.1
$region0: #{_lambda_.1}
  #allocation0 [shape = 'u32[]', space=smem, size = 0x4, offset = 0x4, fixed_abs, tag = 'smem constant byte address 0x4 - core index']
  #allocation1 [shape = 'u32[72,128]{1,0:T(1,128)}', space=vmem, size = 0x9000, scoped, tag = 'internal scratch']
  #allocation2 [shape = 'f32[1,32]{1,0:T(1,128)}', space=vmem, size = 0x200, scoped, tag = 'scratch operand']
  #allocation3 [shape = 'f32[1,32]{1,0:T(1,128)}', space=vmem, size = 0x200, scoped, tag = 'scratch operand']
  %s0 = inlined_call_operand.hbm [shape: f32[2,16,32], index: 0, kind: input, shape index: {}]
  %s1 = inlined_call_operand.hbm [shape: f32[1,32,64], index: 1, kind: input, shape index: {}]
  %s2 = inlined_call_operand.vmem [shape: f32[1,1,64], index: 2, kind: input, shape index: {}]
  %s3 = inlined_call_operand.vmem [shape: f32[1,1,32], index: 3, kind: input, shape index: {}]
  %s4 = inlined_call_operand.hbm [shape: f32[8,8], index: 4, kind: input, shape index: {}]
  %s5 = inlined_call_operand.hbm [shape: f32[2,16,32], index: 5, kind: output, shape index: {}]
  %s6 = sld [smem:[#allocation0]]
  $region69: #{_lambda_.1} parent=0
    _
  %s8 = ssub.s32 1, %s6
  %s9 = scalar_select 0, %s8, %s6
  $region1: #{_lambda_.1} parent=0
    #allocation4 [shape = 'u8[8192]{0}', space=vmem, size = 0x2000, scoped, tag = 'input window, operand 0']
    #allocation5 [shape = 's32[2]{0}', space=sflag, size = 0x8, scoped, tag = 'scoped memory for _lambda_.1']
    #allocation6 [shape = 's32[2]{0}', space=sflag, size = 0x8, scoped, tag = 'scoped memory for _lambda_.1']
    #allocation7 [shape = 'u8[16384]{0}', space=vmem, size = 0x4000, scoped, tag = 'input window, operand 1, single buffered']
    #allocation8 [shape = 's32[1]{0}', space=sflag, size = 0x4, scoped, tag = 'scoped memory for _lambda_.1']
    #allocation9 [shape = 'u8[4096]{0}', space=vmem, size = 0x1000, scoped, tag = 'input window, operand 4, single buffered']
    #allocation10 [shape = 'u8[8192]{0}', space=vmem, size = 0x2000, scoped, tag = 'output window, operand 0']
    %10 = vsyncpa [#allocation5], 0
    %s11 = scalar_lea.sflag [#allocation5], 1
    %12 = vsyncpa %s11, 0
    %13 = vsyncpa [#allocation8], 0
    %14 = vsyncpa [#allocation6], 0
    %s15 = scalar_lea.sflag [#allocation6], 1
    %16 = vsyncpa %s15, 0
    loop: start=0, step=1, limit=6
    $region2: #{_lambda_.1} parent=1 // loop_pre_header
      _
    $region3: #{_lambda_.1} parent=1 // loop_header
      %s18 = sphi 0, %s22
      %p19 = scmp.ge.s32.totalorder %s18, 6
      %s25 = sphi 0, %s44
      %s26 = sphi 0, %s40
      %s27 = sphi 0, %s36
      %s28 = sphi 0, %s25
      %s29 = sphi 0, %s26
      %s30 = sphi 0, %s27
      %s31 = sphi 0, %s28
      %s32 = sphi 0, %s29
      %s33 = sphi 0, %s30
      %s51 = sphi 0, %s53
      %s54 = sphi 0, %s51
      %s55 = sphi 0, %s54
      %s71 = sphi 0, %s55
      %s77 = sphi 0, %s79
      %s80 = sphi 0, %s77
      %s81 = sphi 0, %s80
      %s97 = sphi 0, %s81
      %s103 = sphi 0, %s105
      %s106 = sphi 0, %s103
      %s107 = sphi 0, %s106
      %s123 = sphi 0, %s107
      %s129 = sphi 0, %s131
      %s132 = sphi 0, %s129
      %s133 = sphi 0, %s132
      %s149 = sphi 0, %s133
      %s153 = sphi 0, %s153
      %s155 = sphi 0, %s153
      %s156 = sphi 0, %s155
      %s170 = sphi 0, %s156
      %s180 = sphi 0, %s182
      %s183 = sphi 0, %s180
      %s184 = sphi 0, %s183
      %s200 = sphi 0, %s184
    $region4: #{_lambda_.1} parent=1 // loop_header_branch
      %21 = sbr.rel (%p19) target = $region8
    $region5: #{_lambda_.1} parent=1 // loop_body
      %s23 = ssub.s32 %s18, 1
      %s24 = ssub.s32 %s18, 2
      %s34 = sadd.s32 1, %s27
      %p35 = scmp.ge.s32.totalorder %s34, 2
      %s36 = scalar_select %p35, 0, %s34
      %s37 = sadd.s32 1, %s26
      %s38 = scalar_select %p35, %s37, %s26
      %p39 = scmp.ge.s32.totalorder %s38, 1
      %s40 = scalar_select %p39, 0, %s38
      %s41 = sadd.s32 1, %s25
      %s42 = scalar_select %p39, %s41, %s25
      %p43 = scmp.ge.s32.totalorder %s42, 2
      %s44 = scalar_select %p43, 0, %s42
      %s45 = ssub.s32 %s25, %s44
      %s46 = ssub.s32 %s27, %s36
      %s47 = sor.u32 %s45, %s46
      %s48 = ssub.s32 %s26, %s40
      %s49 = sor.u32 %s47, %s48
      %p50 = scmp.eq.s32.totalorder %s49, 0
      %s52 = sadd.s32 %s51, 1
      %s53 = scalar_select %p50, %s51, %s52
      %p56 = pneg %p50
      %p57 = scmp.eq.s32.totalorder %s18, 3
      %p58 = por %p56, %p57
      %p59 = scmp.ne.s32.totalorder %s51, %s54
      %p60 = scmp.eq.s32.totalorder %s18, 0
      %p61 = por %p59, %p60
      %p62 = scmp.ne.s32.totalorder %s51, %s54
      %p63 = scmp.eq.s32.totalorder %s23, 3
      %p64 = por %p62, %p63
      %p65 = scmp.ne.s32.totalorder %s54, %s55
      %p66 = scmp.eq.s32.totalorder %s23, 0
      %p67 = por %p65, %p66
      %p68 = scmp.ne.s32.totalorder %s54, %s55
      %p69 = scmp.eq.s32.totalorder %s24, 3
      %p70 = por %p68, %p69
      %p72 = scmp.ne.s32.totalorder %s55, %s71
      %p73 = scmp.eq.s32.totalorder %s24, 0
      %p74 = por %p72, %p73
      %s75 = ssub.s32 %s26, %s40
      %p76 = scmp.eq.s32.totalorder %s75, 0
      %s78 = sadd.s32 %s77, 1
      %s79 = scalar_select %p76, %s77, %s78
      %p82 = pneg %p76
      %p83 = scmp.eq.s32.totalorder %s18, 3
      %p84 = por %p82, %p83
      %p85 = scmp.ne.s32.totalorder %s77, %s80
      %p86 = scmp.eq.s32.totalorder %s18, 0
      %p87 = por %p85, %p86
      %p88 = scmp.ne.s32.totalorder %s77, %s80
      %p89 = scmp.eq.s32.totalorder %s23, 3
      %p90 = por %p88, %p89
      %p91 = scmp.ne.s32.totalorder %s80, %s81
      %p92 = scmp.eq.s32.totalorder %s23, 0
      %p93 = por %p91, %p92
      %p94 = scmp.ne.s32.totalorder %s80, %s81
      %p95 = scmp.eq.s32.totalorder %s24, 3
      %p96 = por %p94, %p95
      %p98 = scmp.ne.s32.totalorder %s81, %s97
      %p99 = scmp.eq.s32.totalorder %s24, 0
      %p100 = por %p98, %p99
      %s101 = ssub.s32 %s26, %s40
      %p102 = scmp.eq.s32.totalorder %s101, 0
      %s104 = sadd.s32 %s103, 1
      %s105 = scalar_select %p102, %s103, %s104
      %p108 = pneg %p102
      %p109 = scmp.eq.s32.totalorder %s18, 3
      %p110 = por %p108, %p109
      %p111 = scmp.ne.s32.totalorder %s103, %s106
      %p112 = scmp.eq.s32.totalorder %s18, 0
      %p113 = por %p111, %p112
      %p114 = scmp.ne.s32.totalorder %s103, %s106
      %p115 = scmp.eq.s32.totalorder %s23, 3
      %p116 = por %p114, %p115
      %p117 = scmp.ne.s32.totalorder %s106, %s107
      %p118 = scmp.eq.s32.totalorder %s23, 0
      %p119 = por %p117, %p118
      %p120 = scmp.ne.s32.totalorder %s106, %s107
      %p121 = scmp.eq.s32.totalorder %s24, 3
      %p122 = por %p120, %p121
      %p124 = scmp.ne.s32.totalorder %s107, %s123
      %p125 = scmp.eq.s32.totalorder %s24, 0
      %p126 = por %p124, %p125
      %s127 = ssub.s32 %s26, %s40
      %p128 = scmp.eq.s32.totalorder %s127, 0
      %s130 = sadd.s32 %s129, 1
      %s131 = scalar_select %p128, %s129, %s130
      %p134 = pneg %p128
      %p135 = scmp.eq.s32.totalorder %s18, 3
      %p136 = por %p134, %p135
      %p137 = scmp.ne.s32.totalorder %s129, %s132
      %p138 = scmp.eq.s32.totalorder %s18, 0
      %p139 = por %p137, %p138
      %p140 = scmp.ne.s32.totalorder %s129, %s132
      %p141 = scmp.eq.s32.totalorder %s23, 3
      %p142 = por %p140, %p141
      %p143 = scmp.ne.s32.totalorder %s132, %s133
      %p144 = scmp.eq.s32.totalorder %s23, 0
      %p145 = por %p143, %p144
      %p146 = scmp.ne.s32.totalorder %s132, %s133
      %p147 = scmp.eq.s32.totalorder %s24, 3
      %p148 = por %p146, %p147
      %p150 = scmp.ne.s32.totalorder %s133, %s149
      %p151 = scmp.eq.s32.totalorder %s24, 0
      %p152 = por %p150, %p151
      %s154 = sadd.s32 %s153, 1
      %p157 = scmp.eq.s32.totalorder %s18, 3
      %p158 = scmp.ne.s32.totalorder %s153, %s155
      %p159 = scmp.eq.s32.totalorder %s18, 0
      %p160 = por %p158, %p159
      %p161 = scmp.ne.s32.totalorder %s153, %s155
      %p162 = scmp.eq.s32.totalorder %s23, 3
      %p163 = por %p161, %p162
      %p164 = scmp.ne.s32.totalorder %s155, %s156
      %p165 = scmp.eq.s32.totalorder %s23, 0
      %p166 = por %p164, %p165
      %p167 = scmp.ne.s32.totalorder %s155, %s156
      %p168 = scmp.eq.s32.totalorder %s24, 3
      %p169 = por %p167, %p168
      %p171 = scmp.ne.s32.totalorder %s156, %s170
      %p172 = scmp.eq.s32.totalorder %s24, 0
      %p173 = por %p171, %p172
      %s174 = ssub.s32 %s25, %s44
      %s175 = ssub.s32 %s27, %s36
      %s176 = sor.u32 %s174, %s175
      %s177 = ssub.s32 %s26, %s40
      %s178 = sor.u32 %s176, %s177
      %p179 = scmp.eq.s32.totalorder %s178, 0
      %s181 = sadd.s32 %s180, 1
      %s182 = scalar_select %p179, %s180, %s181
      %p185 = pneg %p179
      %p186 = scmp.eq.s32.totalorder %s18, 3
      %p187 = por %p185, %p186
      %p188 = scmp.ne.s32.totalorder %s180, %s183
      %p189 = scmp.eq.s32.totalorder %s18, 0
      %p190 = por %p188, %p189
      %p191 = scmp.ne.s32.totalorder %s180, %s183
      %p192 = scmp.eq.s32.totalorder %s23, 3
      %p193 = por %p191, %p192
      %p194 = scmp.ne.s32.totalorder %s183, %s184
      %p195 = scmp.eq.s32.totalorder %s23, 0
      %p196 = por %p194, %p195
      %p197 = scmp.ne.s32.totalorder %s183, %s184
      %p198 = scmp.eq.s32.totalorder %s24, 3
      %p199 = por %p197, %p198
      %p201 = scmp.ne.s32.totalorder %s184, %s200
      %p202 = scmp.eq.s32.totalorder %s24, 0
      %p203 = por %p201, %p202
      %p204 = scmp.le.s32.totalorder 1, %s18
      %p205 = scmp.lt.s32.totalorder %s18, 5
      %p206 = pnand %p204, %p205
      %p207 = pneg %p206
      // Predicated region
      $region9: #{_lambda_.1} parent=5 // pred_check
        _
      $region10: #{_lambda_.1} parent=5 // pred_check_branch
        %209 = sbr.rel (%p206) target = $region12
      $region11: #{_lambda_.1} parent=5 // pred_region
        %s210 = ssub.s32 %s18, 1
        // Predicated region
        $region13: #{_lambda_.1} parent=11 // pred_check
          %p211 = pneg %p93
        $region14: #{_lambda_.1} parent=11 // pred_check_branch
          %213 = sbr.rel (%p211) target = $region16
        $region15: #{_lambda_.1} parent=11 // pred_region
          %215 = vsyncadd [#allocation8], 0
          %s216 = smul.addr %s29, 4
          %s217 = smul.addr %s216, 8
          %s218 = scalar_lea.hbm %s1, %s217
          %s219 = sshll.u32 %s218, 4
          %s220 = int_to_ptr.hbm [resolvable:$true] %s219
          %s221 = sshll.u32 [#allocation7], 4
          %s222 = int_to_ptr.vmem [resolvable:$true] %s221
          %227 = dma.hbm_to_vmem [thread:$0]  %s220, 512, %s222, [#allocation8], 128, 128, 8
        $region16: #{_lambda_.1} parent=11 // pred_fallthru
          _
        // Predicated region
        $region17: #{_lambda_.1} parent=11 // pred_check
          %p228 = pneg %p119
        $region18: #{_lambda_.1} parent=11 // pred_check_branch
          %230 = sbr.rel (%p228) target = $region20
        $region19: #{_lambda_.1} parent=11 // pred_region
          %p231 = scmp.lt.s32.totalorder %s29, 0
          %s232 = scalar_select %p231, %s29, 0
          %s233 = scalar_lea.vmem %s2, %s232
        $region20: #{_lambda_.1} parent=11 // pred_fallthru
          _
        // Predicated region
        $region21: #{_lambda_.1} parent=11 // pred_check
          %p234 = pneg %p145
        $region22: #{_lambda_.1} parent=11 // pred_check_branch
          %236 = sbr.rel (%p234) target = $region24
        $region23: #{_lambda_.1} parent=11 // pred_region
          %p237 = scmp.lt.s32.totalorder %s29, 0
          %s238 = scalar_select %p237, %s29, 0
          %s239 = scalar_lea.vmem %s3, %s238
        $region24: #{_lambda_.1} parent=11 // pred_fallthru
          _
        // Predicated region
        $region25: #{_lambda_.1} parent=11 // pred_check
          %p240 = pneg %p166
        $region26: #{_lambda_.1} parent=11 // pred_check_branch
          %242 = sbr.rel (%p240) target = $region28
        $region27: #{_lambda_.1} parent=11 // pred_region
          %244 = vsyncadd [#allocation8], 0
          %s246 = sshll.u32 %s4, 4
          %s247 = int_to_ptr.hbm [resolvable:$true] %s246
          %s248 = sshll.u32 [#allocation9], 4
          %s249 = int_to_ptr.vmem [resolvable:$true] %s248
          %251 = dma.hbm_to_vmem [thread:$0]  %s247, 128, %s249, [#allocation8]
        $region28: #{_lambda_.1} parent=11 // pred_fallthru
          _
      $region12: #{_lambda_.1} parent=5 // pred_fallthru
        _
      %p252 = scmp.lt.s32.totalorder %s18, 4
      // Predicated region
      $region29: #{_lambda_.1} parent=5 // pred_check
        %p253 = pneg %p252
      $region30: #{_lambda_.1} parent=5 // pred_check_branch
        %255 = sbr.rel (%p253) target = $region32
      $region31: #{_lambda_.1} parent=5 // pred_region
        // Predicated region
        $region33: #{_lambda_.1} parent=31 // pred_check
          %p256 = pneg %p61
        $region34: #{_lambda_.1} parent=31 // pred_check_branch
          %258 = sbr.rel (%p256) target = $region36
        $region35: #{_lambda_.1} parent=31 // pred_region
          %s259 = sand.u32 %s51, 1
          %s260 = scalar_lea.sflag [#allocation5], %s259
          %s261 = sand.u32 %s51, 1
          %s262 = smul.addr %s261, 8
          %s263 = scalar_lea.vmem [#allocation4], %s262
          %265 = vsyncadd %s260, 0
          %s266 = sadd.s32 %s26, %s27
          %s267 = smul.addr %s25, 2
          %s268 = sadd.s32 %s266, %s267
          %s269 = smul.addr %s268, 8
          %s270 = scalar_lea.hbm %s0, %s269
          %s272 = sshll.u32 %s270, 4
          %s273 = int_to_ptr.hbm [resolvable:$true] %s272
          %s274 = sshll.u32 %s263, 4
          %s275 = int_to_ptr.vmem [resolvable:$true] %s274
          %277 = dma.hbm_to_vmem [thread:$0]  %s273, 128, %s275, %s260
        $region36: #{_lambda_.1} parent=31 // pred_fallthru
          _
      $region32: #{_lambda_.1} parent=5 // pred_fallthru
        _
      %p278 = scmp.le.s32.totalorder 1, %s18
      %p279 = scmp.lt.s32.totalorder %s18, 5
      %p280 = pnand %p278, %p279
      %p281 = pneg %p280
      // Predicated region
      $region37: #{_lambda_.1} parent=5 // pred_check
        _
      $region38: #{_lambda_.1} parent=5 // pred_check_branch
        %283 = sbr.rel (%p280) target = $region40
      $region39: #{_lambda_.1} parent=5 // pred_region
        %s284 = ssub.s32 %s18, 1
        %s285 = sand.u32 %s54, 1
        %s286 = scalar_lea.sflag [#allocation5], %s285
        %s287 = sand.u32 %s54, 1
        %s288 = smul.addr %s287, 8
        %s289 = scalar_lea.vmem [#allocation4], %s288
        // Predicated region
        $region41: #{_lambda_.1} parent=39 // pred_check
          %p290 = pneg %p67
        $region42: #{_lambda_.1} parent=39 // pred_check_branch
          %292 = sbr.rel (%p290) target = $region44
        $region43: #{_lambda_.1} parent=39 // pred_region
          %294 = dma.done %s286, 128
        $region44: #{_lambda_.1} parent=39 // pred_fallthru
          _
        // Predicated region
        $region45: #{_lambda_.1} parent=39 // pred_check
          %p295 = pneg %p93
        $region46: #{_lambda_.1} parent=39 // pred_check_branch
          %297 = sbr.rel (%p295) target = $region48
        $region47: #{_lambda_.1} parent=39 // pred_region
          %299 = dma.done [#allocation8], 512
        $region48: #{_lambda_.1} parent=39 // pred_fallthru
          _
        // Predicated region
        $region49: #{_lambda_.1} parent=39 // pred_check
          %p300 = pneg %p166
        $region50: #{_lambda_.1} parent=39 // pred_check_branch
          %302 = sbr.rel (%p300) target = $region52
        $region51: #{_lambda_.1} parent=39 // pred_region
          %304 = dma.done [#allocation8], 128
        $region52: #{_lambda_.1} parent=39 // pred_fallthru
          _
        %s305 = sand.u32 %s54, 1
        %s306 = scalar_lea.sflag [#allocation5], %s305
        %s307 = sand.u32 %s54, 1
        %s308 = smul.addr %s307, 8
        %s309 = scalar_lea.vmem [#allocation4], %s308
        %p310 = pneg %p67
        %p311 = pneg %p64
        %p312 = pneg %p93
        %p313 = pneg %p90
        %p314 = scmp.lt.s32.totalorder %s29, 0
        %s315 = scalar_select %p314, %s29, 0
        %s316 = scalar_lea.vmem %s2, %s315
        %p317 = pneg %p119
        %p318 = pneg %p116
        %p319 = scmp.lt.s32.totalorder %s29, 0
        %s320 = scalar_select %p319, %s29, 0
        %s321 = scalar_lea.vmem %s3, %s320
        %p322 = pneg %p145
        %p323 = pneg %p142
        %p324 = pneg %p166
        %p325 = pneg %p163
        %p326 = pneg %p196
        %p327 = pneg %p193
        %s328 = sand.u32 %s183, 1
        %s329 = scalar_lea.sflag [#allocation6], %s328
        %s330 = sand.u32 %s183, 1
        %s331 = smul.addr %s330, 8
        %s332 = scalar_lea.vmem [#allocation10], %s331
        %p333 = scmp.lt.s32.totalorder %s29, 0
        %s334 = scalar_select %p333, %s29, 0
        %s335 = scalar_lea.vmem %s2, %s334
        %p336 = scmp.lt.s32.totalorder %s29, 0
        %s337 = scalar_select %p336, %s29, 0
        %s338 = scalar_lea.vmem %s3, %s337
        %p339 = scmp.eq.s32.totalorder %s30, 0
        // Predicated region
        $region53: #{_lambda_.1} parent=39 // pred_check
          %p340 = pneg %p339
        $region54: #{_lambda_.1} parent=39 // pred_check_branch
          %342 = sbr.rel (%p340) target = $region56
        $region55: #{_lambda_.1} parent=39 // pred_region
          %vm343 = vcmask 253952
          %344 = vst.msk [vmem:[#allocation2] sm:$0x1] %vm343, 1.0
          %345 = vst.msk [vmem:[#allocation3] sm:$0x1] %vm343, 0.0
        $region56: #{_lambda_.1} parent=39 // pred_fallthru
          _
        %v346 = vld [vmem:[%s289] sm:$0xff]
        %v347 = vld [vmem:[#allocation7] sm:$0xff]
        %v348 = vld [vmem:[#allocation7 + $0x8] sm:$0xff]
        %v349 = vld [vmem:[#allocation7 + $0x10] sm:$0xff]
        %v350 = vld [vmem:[#allocation7 + $0x18] sm:$0xff]
        %v351 = vld [vmem:[%s335] sm:$0x1]
        %v353 = vperm.slane %v351, 0
        %vm355 = vcmask 261120
        %v357 = vsel %vm355, %v346, 0
        %359 = vmatpush.msra.mxu0 0.0
        %360 = vmatpush.msra.mxu0 0.0
        %361 = vmatpush.msra.mxu0 0.0
        %362 = vmatpush.msra.mxu0 0.0
        %363 = vmatpush.msra.mxu0 0.0
        %364 = vmatpush.msra.mxu0 0.0
        %365 = vmatpush.msra.mxu0 0.0
        %366 = vmatpush.msra.mxu0 0.0
        %367 = vmatpush.msra.mxu0 0.0
        %368 = vmatpush.msra.mxu0 0.0
        %369 = vmatpush.msra.mxu0 0.0
        %370 = vmatpush.msra.mxu0 0.0
        %371 = vmatpush.msra.mxu0 %v350
        %372 = vmatpush.msra.mxu0 %v349
        %373 = vmatpush.msra.mxu0 %v348
        %374 = vmatpush.msra.mxu0 %v347
        %375 = vmatmul.f32.gmra.mxu0 %v357
        %v376 = vpop.f32.mrf.mxu0
        %v377 = vadd.f32 %v353, %v376
        %378 = vdwg.mxu0
        %v379 = vxor.u32 %v377, 2147483648
        %v380 = vmul.f32 %v379, 1.442695
        %v381 = vpow.pop %v380
        %v382 = vadd.f32 %v381, 1.0
        %v383 = vrcp.pop %v382
        %v384 = vmul.f32 %v382, %v383
        %v385 = vsub.f32 1.0, %v384
        %v386 = vmul.f32 %v383, %v385
        %v387 = vadd.f32 %v383, %v386
        %vm388 = vweird.f32 %v382
        %vm389 = vweird.f32 %v383
        %vm390 = vmor %vm388, %vm389
        %v391 = vsel %vm390, %v383, %v387
        %v392 = vand.u32 2147483647, %v382
        %vm393 = vcmp.eq.f32.partialorder %v392, 8.507059e+37
        %v394 = vand.u32 %v382, 2147483648
        %v395 = vor.u32 1.1754944e-38, %v394
        %v396 = vsel %vm393, %v395, %v391
        %v397 = vmul.f32 1.0, %v396
        %v398 = vsub.f32 0.0, %v397
        %v399 = vld [vmem:[%s338] sm:$0x1]
        %v401 = vperm.slane %v399, 0
        %402 = vrot.lane.b32.xlu0 %v401, 32
        %v403 = vpop.permute.xlu0 %402
        %v405 = vmul.f32 %v398, %v403
        %v406 = vmul.f32 %v405, 1.442695
        %v407 = vpow.pop %v406
        %v408 = vmin.f32 %v407, 0.99999
        %v409 = vmin.f32 %v405, -1.000005e-05
        %v410 = vmul.f32 %v408, %v408
        %v411 = vsub.f32 1.0, %v410
        %v412 = vmax.f32 %v411, 1e-05
        %v413 = vrsqrt.pop %v412
        %v414 = vmul.f32 %v413, %v412
        %v415 = vmul.f32 %v414, %v413
        %v416 = vmul.f32 0.5, %v415
        %v417 = vsub.f32 1.5, %v416
        %v418 = vmul.f32 %v413, %v417
        %v419 = vmul.f32 %v412, %v418
        %vm420 = vcmp.eq.f32.partialorder %v412, inf
        %v421 = vsel %vm420, %v412, %v419
        %vm422 = vcmp.eq.f32.partialorder %v412, 0.0
        %v423 = vand.u32 %v412, 2147483648
        %v424 = vsel %vm422, %v423, %v421
        %v425 = vmul.f32 %v346, %v397
        %427 = vrot.lane.b32.xlu0 %v424, 96
        %v428 = vpop.permute.xlu0 %427
        %v430 = vmul.f32 %v425, %v428
        %v431 = vld [vmem:[#allocation9] sm:$0xff]
        %433 = vrot.lane.b32.xlu0 %v409, 96
        %v434 = vpop.permute.xlu0 %433
        %vm436 = vcmask 64512
        %v438 = vsel %vm436, %v431, 0
        %440 = vmatpush.msra.mxu0 0.0
        %441 = vmatpush.msra.mxu0 0.0
        %442 = vmatpush.msra.mxu0 0.0
        %443 = vmatpush.msra.mxu0 0.0
        %444 = vmatpush.msra.mxu0 0.0
        %445 = vmatpush.msra.mxu0 0.0
        %446 = vmatpush.msra.mxu0 0.0
        %447 = vmatpush.msra.mxu0 0.0
        %448 = vmatpush.msra.mxu0 0.0
        %449 = vmatpush.msra.mxu0 0.0
        %450 = vmatpush.msra.mxu0 0.0
        %451 = vmatpush.msra.mxu0 0.0
        %452 = vmatpush.msra.mxu0 0.0
        %453 = vmatpush.msra.mxu0 0.0
        %454 = vmatpush.msra.mxu0 0.0
        %455 = vmatpush.msra.mxu0 %v434
        %456 = vmatmul.f32.gmra.mxu0 %v438
        %v457 = vpop.f32.mrf.mxu0
        %v458 = vadd.f32 0.0, %v457
        %459 = vdwg.mxu0
        %v460 = vsub.f32 %v458, %v434
        %v461 = vld [vmem:[#allocation2] sm:$0x1]
        %v462 = vmul.f32 %v460, 1.442695
        %v463 = vpow.pop %v462
        %v465 = vperm.slane %v461, 0
        %v467 = vmul.f32 %v465, %v463
        %v468 = vmax.f32 %v467, 1e-07
        %v469 = vadd.f32 %v430, 1e-07
        %v470 = vrcp.pop %v468
        %v471 = vmul.f32 %v468, %v470
        %v472 = vsub.f32 1.0, %v471
        %v473 = vmul.f32 %v470, %v472
        %v474 = vadd.f32 %v470, %v473
        %vm475 = vweird.f32 %v468
        %vm476 = vweird.f32 %v470
        %vm477 = vmor %vm475, %vm476
        %v478 = vsel %vm477, %v470, %v474
        %v479 = vand.u32 2147483647, %v468
        %vm480 = vcmp.eq.f32.partialorder %v479, 8.507059e+37
        %v481 = vand.u32 %v468, 2147483648
        %v482 = vor.u32 1.1754944e-38, %v481
        %v483 = vsel %vm480, %v482, %v478
        %v484 = vmul.f32 %v469, %v483
        %485 = vmatpush.msra.mxu0 0.0
        %486 = vmatpush.msra.mxu0 0.0
        %487 = vmatpush.msra.mxu0 0.0
        %488 = vmatpush.msra.mxu0 0.0
        %489 = vmatpush.msra.mxu0 0.0
        %490 = vmatpush.msra.mxu0 0.0
        %491 = vmatpush.msra.mxu0 0.0
        %492 = vmatpush.msra.mxu0 0.0
        %493 = vmatpush.msra.mxu0 0.0
        %494 = vmatpush.msra.mxu0 0.0
        %495 = vmatpush.msra.mxu0 0.0
        %496 = vmatpush.msra.mxu0 0.0
        %497 = vmatpush.msra.mxu0 0.0
        %498 = vmatpush.msra.mxu0 0.0
        %499 = vmatpush.msra.mxu0 0.0
        %500 = vmatpush.msra.mxu0 %v484
        %501 = vmatmul.f32.gmra.mxu0 %v438
        %v502 = vpop.f32.mrf.mxu0
        %v503 = vadd.f32 0.0, %v502
        %504 = vdwg.mxu0
        %v505 = vld [vmem:[#allocation3] sm:$0x1]
        %v507 = vperm.slane %v505, 0
        %v509 = vadd.f32 %v507, %v503
        %v510 = vmul.f32 %v468, %v509
        %511 = vst.msk [vmem:[%s332] sm:$0xff] %vm355, %v510
        %v512 = vld [vmem:[#allocation2] sm:$0x1]
        %v513 = vmul.f32 %v458, 1.442695
        %v514 = vpow.pop %v513
        %516 = vst [vmem:[#allocation1] sm:$0xff] %v514
        %s517 = scalar_lea.vmem [#allocation1], 7
        %v518 = vld [vmem:[%s517] ss:$9 sm:$0xff]
        %v520 = vmul.f32 %v512, %v518
        %vm521 = vcmask 253952
        %522 = vst.msk [vmem:[#allocation2] sm:$0x1] %vm521, %v520
        %v523 = vld [vmem:[#allocation3] sm:$0x1]
        %525 = vst [vmem:[#allocation1] sm:$0xff] %v503
        %s526 = scalar_lea.vmem [#allocation1], 7
        %v527 = vld [vmem:[%s526] ss:$9 sm:$0xff]
        %v529 = vadd.f32 %v523, %v527
        %530 = vst.msk [vmem:[#allocation3] sm:$0x1] %vm521, %v529
        %s531 = sand.u32 %s183, 1
        %s532 = scalar_lea.sflag [#allocation6], %s531
        %s533 = sand.u32 %s183, 1
        %s534 = smul.addr %s533, 8
        %s535 = scalar_lea.vmem [#allocation10], %s534
        // Predicated region
        $region57: #{_lambda_.1} parent=39 // pred_check
          %p536 = pneg %p193
        $region58: #{_lambda_.1} parent=39 // pred_check_branch
          %538 = sbr.rel (%p536) target = $region60
        $region59: #{_lambda_.1} parent=39 // pred_region
          %540 = vsyncadd %s532, 0
          %s541 = sadd.s32 %s29, %s30
          %s542 = smul.addr %s28, 2
          %s543 = sadd.s32 %s541, %s542
          %s544 = smul.addr %s543, 8
          %s545 = scalar_lea.hbm %s5, %s544
          %s547 = sshll.u32 %s535, 4
          %s548 = int_to_ptr.vmem [resolvable:$true] %s547
          %s549 = sshll.u32 %s545, 4
          %s550 = int_to_ptr.hbm [resolvable:$true] %s549
          %552 = dma.vmem_to_hbm [thread:$0]  %s548, 128, %s550, %s532
        $region60: #{_lambda_.1} parent=39 // pred_fallthru
          _
      $region40: #{_lambda_.1} parent=5 // pred_fallthru
        _
      %p553 = scmp.le.s32.totalorder 2, %s18
      // Predicated region
      $region61: #{_lambda_.1} parent=5 // pred_check
        %p554 = pneg %p553
      $region62: #{_lambda_.1} parent=5 // pred_check_branch
        %556 = sbr.rel (%p554) target = $region64
      $region63: #{_lambda_.1} parent=5 // pred_region
        %s557 = ssub.s32 %s18, 2
        // Predicated region
        $region65: #{_lambda_.1} parent=63 // pred_check
          %p558 = pneg %p199
        $region66: #{_lambda_.1} parent=63 // pred_check_branch
          %560 = sbr.rel (%p558) target = $region68
        $region67: #{_lambda_.1} parent=63 // pred_region
          %s561 = sand.u32 %s184, 1
          %s562 = scalar_lea.sflag [#allocation6], %s561
          %s563 = sand.u32 %s184, 1
          %s564 = smul.addr %s563, 8
          %s565 = scalar_lea.vmem [#allocation10], %s564
          %567 = dma.done %s562, 128
        $region68: #{_lambda_.1} parent=63 // pred_fallthru
          _
      $region64: #{_lambda_.1} parent=5 // pred_fallthru
        _
    $region6: #{_lambda_.1} parent=1 // loop_footer
      %s22 = sadd.s32 1, %s18
    $region7: #{_lambda_.1} parent=1 // loop_footer_branch
      %17 = sbr.rel target = $region3
    $region8: #{_lambda_.1} parent=1 // loop_exit
      _
    %568 = vsyncpa [#allocation5], 1
    %s569 = scalar_lea.sflag [#allocation5], 1
    %570 = vsyncpa %s569, 1
    %571 = vsyncpa [#allocation8], 1
    %572 = vsyncpa [#allocation6], 1
    %s573 = scalar_lea.sflag [#allocation6], 1
    %574 = vsyncpa %s573, 1

</llo_original>
